<compile_context>
chip_gen: v5e
topology: v5e:2x2
jax: 0.10.0
libtpu: 0.0.40
codegen_flags: <defaults>
</compile_context>

<pallas_src>
import jax
import jax.numpy as jnp
from jax.experimental import pallas as pl
from jax.experimental.pallas import tpu as pltpu

_H1 = 256     # fc1 output features
_H2 = 128     # fc2 output features
_LANE = 128   # TPU lane width


def _round_up(x: int, m: int) -> int:
    return ((x + m - 1) // m) * m


def _sac_policy_kernel(x_ref, w1_ref, b1_ref, w2_ref, b2_ref, w3_ref, b3_ref,
                       logits_ref, lse_ref):
    # fc1 + ReLU  (bf16 MXU inputs, f32 accumulation / elementwise)
    x = x_ref[...].astype(jnp.bfloat16)
    h1 = jnp.dot(x, w1_ref[...], preferred_element_type=jnp.float32) + b1_ref[...]
    h1 = jnp.maximum(h1, 0.0)

    # fc2 + ReLU
    h2 = jnp.dot(h1.astype(jnp.bfloat16), w2_ref[...],
                 preferred_element_type=jnp.float32) + b2_ref[...]
    h2 = jnp.maximum(h2, 0.0)

    # fc_logits (action dim padded to full lane width; padded lanes carry a
    # huge-negative bias so exp() of them underflows to exactly 0)
    logits = jnp.dot(h2.astype(jnp.bfloat16), w3_ref[...],
                     preferred_element_type=jnp.float32) + b3_ref[...]
    logits_ref[...] = logits

    # Categorical(logits=...) normalizer: stable logsumexp over the action axis.
    m = jnp.max(logits, axis=-1, keepdims=True)
    lse_ref[...] = m + jnp.log(jnp.sum(jnp.exp(logits - m), axis=-1, keepdims=True))


def _pick_batch_tile(B: int, S: int) -> int:
    """Largest sublane-aligned batch tile that keeps double-buffered VMEM modest."""
    if B <= 512:
        return _round_up(B, 8)
    # Per-row VMEM footprint (bytes), x2 for double buffering of x + outputs,
    # plus f32 intermediates h1/h2 held live in the body.
    per_row = 2 * (S * 4 + (_LANE + 1) * 4) + (_H1 + _H2) * 4
    budget = 8 << 20  # ~8 MiB for the batch-proportional part
    tb = max(64, min(512, budget // max(per_row, 1)))
    return _round_up(min(tb, 512), 8)


@jax.jit
def sac_policy_forward(state_embedding, params):
    """Returns (action_logits, log_probs) of the Categorical the PyTorch module builds."""
    w1, b1, w2, b2, w3, b3 = params
    B, S = state_embedding.shape
    A = w3.shape[1]

    TB = _pick_batch_tile(B, S)
    B_pad = _round_up(B, TB)
    # Lane-dense output: pad the action dim up to a multiple of 128.
    A_pad = _round_up(max(A, _LANE), _LANE)

    x = state_embedding.astype(jnp.float32)
    if B_pad != B:
        x = jnp.pad(x, ((0, B_pad - B), (0, 0)))
    if A_pad != A:
        w3 = jnp.pad(w3, ((0, 0), (0, A_pad - A)))
        # Padded action lanes get a huge-negative bias -> contribute 0 to logsumexp.
        b3 = jnp.pad(b3, ((0, 0), (0, A_pad - A)), constant_values=-1e30)

    flops = 2 * B_pad * (S * _H1 + _H1 * _H2 + _H2 * A_pad)
    bytes_accessed = (x.size * 4
                      + w1.size * 2 + w2.size * 2 + w3.size * 2
                      + b1.size * 4 + b2.size * 4 + b3.size * 4
                      + B_pad * A_pad * 4 + B_pad * 4)
    cost = pl.CostEstimate(flops=flops,
                           transcendentals=B_pad * (A_pad + 1),
                           bytes_accessed=bytes_accessed)

    logits_pad, lse = pl.pallas_call(
        _sac_policy_kernel,
        out_shape=(
            jax.ShapeDtypeStruct((B_pad, A_pad), jnp.float32),  # padded raw logits
            jax.ShapeDtypeStruct((B_pad, 1), jnp.float32),      # logsumexp per row
        ),
        grid=(B_pad // TB,),
        in_specs=[
            pl.BlockSpec((TB, S), lambda i: (i, 0)),        # x: tiled over batch
            pl.BlockSpec((S, _H1), lambda i: (0, 0)),       # w1: VMEM-resident
            pl.BlockSpec((1, _H1), lambda i: (0, 0)),       # b1
            pl.BlockSpec((_H1, _H2), lambda i: (0, 0)),     # w2
            pl.BlockSpec((1, _H2), lambda i: (0, 0)),       # b2
            pl.BlockSpec((_H2, A_pad), lambda i: (0, 0)),   # w3 (lane-padded)
            pl.BlockSpec((1, A_pad), lambda i: (0, 0)),     # b3 (lane-padded)
        ],
        out_specs=(
            pl.BlockSpec((TB, A_pad), lambda i: (i, 0)),
            pl.BlockSpec((TB, 1), lambda i: (i, 0)),
        ),
        compiler_params=pltpu.CompilerParams(
            dimension_semantics=("parallel",)),   # shard batch tiles across TCs on v7x
        cost_estimate=cost,
    )(x, w1, b1, w2, b2, w3, b3)

    logits = logits_pad[:B, :A]
    log_probs = logits - lse[:B]
    return logits, log_probs


def init_params(key, state_size, action_size):
    """Deterministic init mirroring nn.Linear defaults: U(-1/sqrt(fan_in), 1/sqrt(fan_in)).

    Weights are stored as (in_features, out_features) in bfloat16 (native MXU dtype);
    biases are (1, out_features) in float32."""
    def linear(key, fan_in, fan_out):
        kw, kb = jax.random.split(key)
        bound = 1.0 / jnp.sqrt(fan_in)
        w = jax.random.uniform(kw, (fan_in, fan_out), jnp.float32, -bound, bound)
        b = jax.random.uniform(kb, (1, fan_out), jnp.float32, -bound, bound)
        return w.astype(jnp.bfloat16), b

    k1, k2, k3 = jax.random.split(key, 3)
    w1, b1 = linear(k1, state_size, _H1)
    w2, b2 = linear(k2, _H1, _H2)
    w3, b3 = linear(k3, _H2, action_size)
    return (w1, b1, w2, b2, w3, b3)


def _reference_forward(x, params):
    """Pure-JAX reference mirroring the kernel's bf16-input / f32-accumulate precision."""
    w1, b1, w2, b2, w3, b3 = params
    f32 = jnp.float32
    bf16 = jnp.bfloat16
    xb = x.astype(bf16).astype(f32)
    h1 = jnp.maximum(xb @ w1.astype(f32) + b1, 0.0)
    h2 = jnp.maximum(h1.astype(bf16).astype(f32) @ w2.astype(f32) + b2, 0.0)
    logits = h2.astype(bf16).astype(f32) @ w3.astype(f32) + b3
    logp = logits - jax.scipy.special.logsumexp(logits, axis=-1, keepdims=True)
    return logits, logp


if __name__ == "__main__":
    key = jax.random.PRNGKey(0)
    k_params, k_x = jax.random.split(key)

    batch = 4
    state_size = 64
    action_size = 12

    params = init_params(k_params, state_size, action_size)
    state_embedding = jax.random.normal(k_x, (batch, state_size), jnp.float32)

    logits, log_probs = sac_policy_forward(state_embedding, params)
    logits = jax.block_until_ready(logits)
    log_probs = jax.block_until_ready(log_probs)

    ref_logits, ref_logp = _reference_forward(state_embedding, params)
    assert logits.shape == (batch, action_size)
    assert log_probs.shape == (batch, action_size)
    assert jnp.allclose(logits, ref_logits, atol=1e-3, rtol=1e-3)
    assert jnp.allclose(log_probs, ref_logp, atol=1e-3, rtol=1e-3)
    assert jnp.allclose(jnp.sum(jnp.exp(log_probs), axis=-1), 1.0, atol=1e-5)

    print("KERNEL_OK")
</pallas_src>

<mosaic_0001>
module attributes {stable_mosaic.version = 11 : i64} {
  func.func @_sac_policy_kernel(%arg0: i32, %arg1: memref<8x64xf32, #tpu.memory_space<vmem>>, %arg2: memref<64x256xbf16, #tpu.memory_space<vmem>>, %arg3: memref<1x256xf32, #tpu.memory_space<vmem>>, %arg4: memref<256x128xbf16, #tpu.memory_space<vmem>>, %arg5: memref<1x128xf32, #tpu.memory_space<vmem>>, %arg6: memref<128x128xbf16, #tpu.memory_space<vmem>>, %arg7: memref<1x128xf32, #tpu.memory_space<vmem>>, %arg8: memref<8x128xf32, #tpu.memory_space<vmem>>, %arg9: memref<8x1xf32, #tpu.memory_space<vmem>>) attributes {dimension_semantics = [#tpu.dimension_semantics<parallel>], iteration_bounds = array<i64: 1>, scalar_prefetch = 0 : i64, scratch_operands = 0 : i64, tpu.core_type = #tpu.core_type<tc>, window_params = [{transform_indices = @transform_0, window_bounds = array<i64: 8, 64>}, {pipeline_mode = #tpu.pipeline_mode<synchronous>, transform_indices = @transform_1, window_bounds = array<i64: 64, 256>}, {pipeline_mode = #tpu.pipeline_mode<synchronous>, transform_indices = @transform_2, window_bounds = array<i64: 1, 256>}, {pipeline_mode = #tpu.pipeline_mode<synchronous>, transform_indices = @transform_3, window_bounds = array<i64: 256, 128>}, {pipeline_mode = #tpu.pipeline_mode<synchronous>, transform_indices = @transform_4, window_bounds = array<i64: 1, 128>}, {pipeline_mode = #tpu.pipeline_mode<synchronous>, transform_indices = @transform_5, window_bounds = array<i64: 128, 128>}, {pipeline_mode = #tpu.pipeline_mode<synchronous>, transform_indices = @transform_6, window_bounds = array<i64: 1, 128>}, {transform_indices = @transform_7, window_bounds = array<i64: 8, 128>}, {transform_indices = @transform_8, window_bounds = array<i64: 8, 1>}]} {
    %c0 = arith.constant 0 : index
    %c0_0 = arith.constant 0 : index
    %0 = vector.load %arg1[%c0, %c0_0] : memref<8x64xf32, #tpu.memory_space<vmem>>, vector<8x64xf32>
    %1 = arith.truncf %0 : vector<8x64xf32> to vector<8x64xbf16>
    %c0_1 = arith.constant 0 : index
    %c0_2 = arith.constant 0 : index
    %2 = vector.load %arg2[%c0_1, %c0_2] : memref<64x256xbf16, #tpu.memory_space<vmem>>, vector<64x256xbf16>
    %cst = arith.constant dense<0.000000e+00> : vector<8x256xf32>
    %3 = tpu.matmul %1, %2, %cst {dimension_numbers = #tpu.dot_dimension_numbers<[1], [0], [0], [1], [0, 0, 1, 1], [], []>} : vector<8x64xbf16>, vector<64x256xbf16>, vector<8x256xf32> -> vector<8x256xf32>
    %c0_3 = arith.constant 0 : index
    %c0_4 = arith.constant 0 : index
    %4 = vector.load %arg3[%c0_3, %c0_4] : memref<1x256xf32, #tpu.memory_space<vmem>>, vector<1x256xf32>
    %5 = vector.broadcast %4 : vector<1x256xf32> to vector<8x256xf32>
    %6 = arith.addf %3, %5 : vector<8x256xf32>
    %cst_5 = arith.constant 0.000000e+00 : f32
    %7 = vector.broadcast %cst_5 : f32 to vector<8x256xf32>
    %8 = arith.maximumf %6, %7 : vector<8x256xf32>
    %9 = arith.truncf %8 : vector<8x256xf32> to vector<8x256xbf16>
    %c0_6 = arith.constant 0 : index
    %c0_7 = arith.constant 0 : index
    %10 = vector.load %arg4[%c0_6, %c0_7] : memref<256x128xbf16, #tpu.memory_space<vmem>>, vector<256x128xbf16>
    %cst_8 = arith.constant dense<0.000000e+00> : vector<8x128xf32>
    %11 = tpu.matmul %9, %10, %cst_8 {dimension_numbers = #tpu.dot_dimension_numbers<[1], [0], [0], [1], [0, 0, 1, 1], [], []>} : vector<8x256xbf16>, vector<256x128xbf16>, vector<8x128xf32> -> vector<8x128xf32>
    %c0_9 = arith.constant 0 : index
    %c0_10 = arith.constant 0 : index
    %12 = vector.load %arg5[%c0_9, %c0_10] : memref<1x128xf32, #tpu.memory_space<vmem>>, vector<1x128xf32>
    %13 = vector.broadcast %12 : vector<1x128xf32> to vector<8x128xf32>
    %14 = arith.addf %11, %13 : vector<8x128xf32>
    %cst_11 = arith.constant 0.000000e+00 : f32
    %15 = vector.broadcast %cst_11 : f32 to vector<8x128xf32>
    %16 = arith.maximumf %14, %15 : vector<8x128xf32>
    %17 = arith.truncf %16 : vector<8x128xf32> to vector<8x128xbf16>
    %c0_12 = arith.constant 0 : index
    %c0_13 = arith.constant 0 : index
    %18 = vector.load %arg6[%c0_12, %c0_13] : memref<128x128xbf16, #tpu.memory_space<vmem>>, vector<128x128xbf16>
    %cst_14 = arith.constant dense<0.000000e+00> : vector<8x128xf32>
    %19 = tpu.matmul %17, %18, %cst_14 {dimension_numbers = #tpu.dot_dimension_numbers<[1], [0], [0], [1], [0, 0, 1, 1], [], []>} : vector<8x128xbf16>, vector<128x128xbf16>, vector<8x128xf32> -> vector<8x128xf32>
    %c0_15 = arith.constant 0 : index
    %c0_16 = arith.constant 0 : index
    %20 = vector.load %arg7[%c0_15, %c0_16] : memref<1x128xf32, #tpu.memory_space<vmem>>, vector<1x128xf32>
    %21 = vector.broadcast %20 : vector<1x128xf32> to vector<8x128xf32>
    %22 = arith.addf %19, %21 : vector<8x128xf32>
    %c0_17 = arith.constant 0 : index
    %c0_18 = arith.constant 0 : index
    %23 = vector.load %arg8[%c0_17, %c0_18] : memref<8x128xf32, #tpu.memory_space<vmem>>, vector<8x128xf32>
    tpu.vector_store %arg8[%c0_17, %c0_18], %22 {strides = array<i32>} : memref<8x128xf32, #tpu.memory_space<vmem>>, vector<8x128xf32>,
    %cst_19 = arith.constant dense<0xFF800000> : vector<8xf32>
    %24 = vector.multi_reduction <maximumf>, %22, %cst_19 [1] : vector<8x128xf32> to vector<8xf32>
    %25 = vector.shape_cast %24 : vector<8xf32> to vector<8x1xf32>
    %26 = vector.broadcast %25 : vector<8x1xf32> to vector<8x128xf32>
    %27 = arith.subf %22, %26 : vector<8x128xf32>
    %28 = math.exp %27 : vector<8x128xf32>
    %cst_20 = arith.constant dense<0.000000e+00> : vector<8xf32>
    %29 = vector.multi_reduction <add>, %28, %cst_20 [1] : vector<8x128xf32> to vector<8xf32>
    %30 = vector.shape_cast %29 : vector<8xf32> to vector<8x1xf32>
    %31 = math.log %30 : vector<8x1xf32>
    %32 = arith.addf %25, %31 : vector<8x1xf32>
    %c0_21 = arith.constant 0 : index
    %c0_22 = arith.constant 0 : index
    %33 = vector.load %arg9[%c0_21, %c0_22] : memref<8x1xf32, #tpu.memory_space<vmem>>, vector<8x1xf32>
    tpu.vector_store %arg9[%c0_21, %c0_22], %32 {strides = array<i32>} : memref<8x1xf32, #tpu.memory_space<vmem>>, vector<8x1xf32>,
    return
  }
  func.func @transform_0(%arg0: i32) -> (i32, i32) {
    %c0_i32 = arith.constant 0 : i32
    %c0_i32_0 = arith.constant 0 : i32
    return %arg0, %c0_i32 : i32, i32
  }
  func.func @transform_1(%arg0: i32) -> (i32, i32) {
    %c0_i32 = arith.constant 0 : i32
    %c0_i32_0 = arith.constant 0 : i32
    %c0_i32_1 = arith.constant 0 : i32
    return %c0_i32, %c0_i32_0 : i32, i32
  }
  func.func @transform_2(%arg0: i32) -> (i32, i32) {
    %c0_i32 = arith.constant 0 : i32
    %c0_i32_0 = arith.constant 0 : i32
    %c0_i32_1 = arith.constant 0 : i32
    return %c0_i32, %c0_i32_0 : i32, i32
  }
  func.func @transform_3(%arg0: i32) -> (i32, i32) {
    %c0_i32 = arith.constant 0 : i32
    %c0_i32_0 = arith.constant 0 : i32
    %c0_i32_1 = arith.constant 0 : i32
    return %c0_i32, %c0_i32_0 : i32, i32
  }
  func.func @transform_4(%arg0: i32) -> (i32, i32) {
    %c0_i32 = arith.constant 0 : i32
    %c0_i32_0 = arith.constant 0 : i32
    %c0_i32_1 = arith.constant 0 : i32
    return %c0_i32, %c0_i32_0 : i32, i32
  }
  func.func @transform_5(%arg0: i32) -> (i32, i32) {
    %c0_i32 = arith.constant 0 : i32
    %c0_i32_0 = arith.constant 0 : i32
    %c0_i32_1 = arith.constant 0 : i32
    return %c0_i32, %c0_i32_0 : i32, i32
  }
  func.func @transform_6(%arg0: i32) -> (i32, i32) {
    %c0_i32 = arith.constant 0 : i32
    %c0_i32_0 = arith.constant 0 : i32
    %c0_i32_1 = arith.constant 0 : i32
    return %c0_i32, %c0_i32_0 : i32, i32
  }
  func.func @transform_7(%arg0: i32) -> (i32, i32) {
    %c0_i32 = arith.constant 0 : i32
    %c0_i32_0 = arith.constant 0 : i32
    return %arg0, %c0_i32 : i32, i32
  }
  func.func @transform_8(%arg0: i32) -> (i32, i32) {
    %c0_i32 = arith.constant 0 : i32
    %c0_i32_0 = arith.constant 0 : i32
    return %arg0, %c0_i32 : i32, i32
  }
}

</mosaic_0001>

<llo_original>
// kernel: sac_policy_forward.1
$region0: #{sac_policy_forward.1}
  #allocation0 [shape = 'u32[]', space=smem, size = 0x4, offset = 0x4, fixed_abs, tag = 'smem constant byte address 0x4 - core index']
  #allocation1 [shape = 'u32[72,128]{1,0:T(1,128)}', space=vmem, size = 0x9000, scoped, tag = 'internal scratch']
  %s0 = inlined_call_operand.vmem [shape: f32[8,64], index: 0, kind: input, shape index: {}]
  %s1 = inlined_call_operand.vmem [shape: bf16[64,256], index: 1, kind: input, shape index: {}]
  %s2 = inlined_call_operand.vmem [shape: f32[1,256], index: 2, kind: input, shape index: {}]
  %s3 = inlined_call_operand.vmem [shape: bf16[256,128], index: 3, kind: input, shape index: {}]
  %s4 = inlined_call_operand.vmem [shape: f32[1,128], index: 4, kind: input, shape index: {}]
  %s5 = inlined_call_operand.vmem [shape: bf16[128,128], index: 5, kind: input, shape index: {}]
  %s6 = inlined_call_operand.vmem [shape: f32[1,128], index: 6, kind: input, shape index: {}]
  %s7 = inlined_call_operand.vmem [shape: f32[8,128], index: 7, kind: output, shape index: {0}]
  %s8 = inlined_call_operand.vmem [shape: f32[8,1], index: 8, kind: output, shape index: {1}]
  %9 = xla_tuple %s7, %s8
  %s10 = sld [smem:[#allocation0]]
  $region46: #{sac_policy_forward.1} parent=0
    _
  %s12 = ssub.s32 1, %s10
  %s13 = scalar_select 0, %s12, %s10
  // Predicated region
  $region2: #{sac_policy_forward.1} parent=0 // pred_check
    _
  $region3: #{sac_policy_forward.1} parent=0 // pred_check_branch
    %15 = sbr.rel (0) target = $region5
  $region4: #{sac_policy_forward.1} parent=0 // pred_region
    _
  $region5: #{sac_policy_forward.1} parent=0 // pred_fallthru
    _
  // Predicated region
  $region6: #{sac_policy_forward.1} parent=0 // pred_check
    _
  $region7: #{sac_policy_forward.1} parent=0 // pred_check_branch
    %17 = sbr.rel (0) target = $region9
  $region8: #{sac_policy_forward.1} parent=0 // pred_region
    _
  $region9: #{sac_policy_forward.1} parent=0 // pred_fallthru
    _
  // Predicated region
  $region10: #{sac_policy_forward.1} parent=0 // pred_check
    _
  $region11: #{sac_policy_forward.1} parent=0 // pred_check_branch
    %19 = sbr.rel (0) target = $region13
  $region12: #{sac_policy_forward.1} parent=0 // pred_region
    _
  $region13: #{sac_policy_forward.1} parent=0 // pred_fallthru
    _
  // Predicated region
  $region14: #{sac_policy_forward.1} parent=0 // pred_check
    _
  $region15: #{sac_policy_forward.1} parent=0 // pred_check_branch
    %21 = sbr.rel (0) target = $region17
  $region16: #{sac_policy_forward.1} parent=0 // pred_region
    _
  $region17: #{sac_policy_forward.1} parent=0 // pred_fallthru
    _
  // Predicated region
  $region18: #{sac_policy_forward.1} parent=0 // pred_check
    _
  $region19: #{sac_policy_forward.1} parent=0 // pred_check_branch
    %23 = sbr.rel (0) target = $region21
  $region20: #{sac_policy_forward.1} parent=0 // pred_region
    _
  $region21: #{sac_policy_forward.1} parent=0 // pred_fallthru
    _
  // Predicated region
  $region22: #{sac_policy_forward.1} parent=0 // pred_check
    _
  $region23: #{sac_policy_forward.1} parent=0 // pred_check_branch
    %25 = sbr.rel (0) target = $region25
  $region24: #{sac_policy_forward.1} parent=0 // pred_region
    _
  $region25: #{sac_policy_forward.1} parent=0 // pred_fallthru
    _
  // Predicated region
  $region26: #{sac_policy_forward.1} parent=0 // pred_check
    _
  $region27: #{sac_policy_forward.1} parent=0 // pred_check_branch
    %27 = sbr.rel (0) target = $region29
  $region28: #{sac_policy_forward.1} parent=0 // pred_region
    _
  $region29: #{sac_policy_forward.1} parent=0 // pred_fallthru
    _
  %v29 = vld [vmem:[%s0] sm:$0xff]
  %v30 = vpack.c.bf16 %v29, %v29
  %v31 = vld [vmem:[%s1] sm:$0xff]
  %v32 = vld [vmem:[%s1 + $0x8] sm:$0xff]
  %v33 = vld [vmem:[%s1 + $0x10] sm:$0xff]
  %v34 = vld [vmem:[%s1 + $0x18] sm:$0xff]
  %v35 = vld [vmem:[%s1 + $0x20] sm:$0xff]
  %v36 = vld [vmem:[%s1 + $0x28] sm:$0xff]
  %v37 = vld [vmem:[%s1 + $0x30] sm:$0xff]
  %v38 = vld [vmem:[%s1 + $0x38] sm:$0xff]
  %v39 = vld [vmem:[%s2] sm:$0x3]
  %v41 = vperm.slane %v39, 0
  %v42 = vperm.slane %v39, 1
  %v53 = vunpack.c.l.b16 %v31
  %v54 = vunpack.c.h.b16 %v31
  %v55 = vunpack.c.l.b16 %v32
  %v56 = vunpack.c.h.b16 %v32
  %v57 = vunpack.c.l.b16 %v33
  %v58 = vunpack.c.h.b16 %v33
  %v59 = vunpack.c.l.b16 %v34
  %v60 = vunpack.c.h.b16 %v34
  %v61 = vunpack.c.l.b16 %v35
  %v62 = vunpack.c.h.b16 %v35
  %v63 = vunpack.c.l.b16 %v36
  %v64 = vunpack.c.h.b16 %v36
  %v65 = vunpack.c.l.b16 %v37
  %v66 = vunpack.c.h.b16 %v37
  %v67 = vunpack.c.l.b16 %v38
  %v68 = vunpack.c.h.b16 %v38
  %v69 = vpack.c.b16 %v55, %v53
  %v70 = vpack.c.b16 %v56, %v54
  %v71 = vpack.c.b16 %v59, %v57
  %v72 = vpack.c.b16 %v60, %v58
  %v73 = vpack.c.b16 %v63, %v61
  %v74 = vpack.c.b16 %v64, %v62
  %v75 = vpack.c.b16 %v67, %v65
  %v76 = vpack.c.b16 %v68, %v66
  %vm85 = vcmask 523264
  %v87 = vsel %vm85, %v30, 0
  %89 = vmatpush.bf16.msra.mxu0 0
  %90 = vmatpush.bf16.msra.mxu0 0
  %91 = vmatpush.bf16.msra.mxu0 0
  %92 = vmatpush.bf16.msra.mxu0 0
  %93 = vmatpush.bf16.msra.mxu0 %v75
  %94 = vmatpush.bf16.msra.mxu0 %v73
  %95 = vmatpush.bf16.msra.mxu0 %v71
  %96 = vmatpush.bf16.msra.mxu0 %v69
  %97 = vmatmul.bf16.gmra.mxu0 %v87
  %v98 = vpop.f32.mrf.mxu0
  %v99 = vadd.f32 %v41, %v98
  %v100 = vpop.f32.mrf.mxu0
  %101 = vdwg.mxu0
  %102 = vmatpush.bf16.msra.mxu0 0
  %103 = vmatpush.bf16.msra.mxu0 0
  %104 = vmatpush.bf16.msra.mxu0 0
  %105 = vmatpush.bf16.msra.mxu0 0
  %106 = vmatpush.bf16.msra.mxu0 %v76
  %107 = vmatpush.bf16.msra.mxu0 %v74
  %108 = vmatpush.bf16.msra.mxu0 %v72
  %109 = vmatpush.bf16.msra.mxu0 %v70
  %110 = vmatmul.bf16.gmra.mxu0 %v87
  %v111 = vpop.f32.mrf.mxu0
  %v112 = vadd.f32 %v42, %v111
  %v113 = vpop.f32.mrf.mxu0
  %114 = vdwg.mxu0
  %v115 = vmax.f32 %v99, 0.0
  %v116 = vmax.f32 %v112, 0.0
  %v117 = vpack.c.bf16 %v115, %v115
  %v118 = vpack.c.bf16 %v116, %v116
  %v119 = vld [vmem:[%s3] sm:$0xf]
  %v120 = vld [vmem:[%s3 + $0x4] sm:$0xf]
  %v121 = vld [vmem:[%s3 + $0x8] sm:$0xf]
  %v122 = vld [vmem:[%s3 + $0xc] sm:$0xf]
  %v123 = vld [vmem:[%s3 + $0x10] sm:$0xf]
  %v124 = vld [vmem:[%s3 + $0x14] sm:$0xf]
  %v125 = vld [vmem:[%s3 + $0x18] sm:$0xf]
  %v126 = vld [vmem:[%s3 + $0x1c] sm:$0xf]
  %v127 = vld [vmem:[%s3 + $0x20] sm:$0xf]
  %v128 = vld [vmem:[%s3 + $0x24] sm:$0xf]
  %v129 = vld [vmem:[%s3 + $0x28] sm:$0xf]
  %v130 = vld [vmem:[%s3 + $0x2c] sm:$0xf]
  %v131 = vld [vmem:[%s3 + $0x30] sm:$0xf]
  %v132 = vld [vmem:[%s3 + $0x34] sm:$0xf]
  %v133 = vld [vmem:[%s3 + $0x38] sm:$0xf]
  %v134 = vld [vmem:[%s3 + $0x3c] sm:$0xf]
  %v135 = vld [vmem:[%s3 + $0x40] sm:$0xf]
  %v136 = vld [vmem:[%s3 + $0x44] sm:$0xf]
  %v137 = vld [vmem:[%s3 + $0x48] sm:$0xf]
  %v138 = vld [vmem:[%s3 + $0x4c] sm:$0xf]
  %v139 = vld [vmem:[%s3 + $0x50] sm:$0xf]
  %v140 = vld [vmem:[%s3 + $0x54] sm:$0xf]
  %v141 = vld [vmem:[%s3 + $0x58] sm:$0xf]
  %v142 = vld [vmem:[%s3 + $0x5c] sm:$0xf]
  %v143 = vld [vmem:[%s3 + $0x60] sm:$0xf]
  %v144 = vld [vmem:[%s3 + $0x64] sm:$0xf]
  %v145 = vld [vmem:[%s3 + $0x68] sm:$0xf]
  %v146 = vld [vmem:[%s3 + $0x6c] sm:$0xf]
  %v147 = vld [vmem:[%s3 + $0x70] sm:$0xf]
  %v148 = vld [vmem:[%s3 + $0x74] sm:$0xf]
  %v149 = vld [vmem:[%s3 + $0x78] sm:$0xf]
  %v150 = vld [vmem:[%s3 + $0x7c] sm:$0xf]
  %v151 = vld [vmem:[%s4] sm:$0x1]
  %v153 = vperm.slane %v151, 0
  %v187 = vunpack.c.l.b16 %v119
  %v188 = vunpack.c.l.b16 %v120
  %v189 = vunpack.c.l.b16 %v121
  %v190 = vunpack.c.l.b16 %v122
  %v191 = vunpack.c.l.b16 %v123
  %v192 = vunpack.c.l.b16 %v124
  %v193 = vunpack.c.l.b16 %v125
  %v194 = vunpack.c.l.b16 %v126
  %v195 = vunpack.c.l.b16 %v127
  %v196 = vunpack.c.l.b16 %v128
  %v197 = vunpack.c.l.b16 %v129
  %v198 = vunpack.c.l.b16 %v130
  %v199 = vunpack.c.l.b16 %v131
  %v200 = vunpack.c.l.b16 %v132
  %v201 = vunpack.c.l.b16 %v133
  %v202 = vunpack.c.l.b16 %v134
  %v203 = vunpack.c.l.b16 %v135
  %v204 = vunpack.c.l.b16 %v136
  %v205 = vunpack.c.l.b16 %v137
  %v206 = vunpack.c.l.b16 %v138
  %v207 = vunpack.c.l.b16 %v139
  %v208 = vunpack.c.l.b16 %v140
  %v209 = vunpack.c.l.b16 %v141
  %v210 = vunpack.c.l.b16 %v142
  %v211 = vunpack.c.l.b16 %v143
  %v212 = vunpack.c.l.b16 %v144
  %v213 = vunpack.c.l.b16 %v145
  %v214 = vunpack.c.l.b16 %v146
  %v215 = vunpack.c.l.b16 %v147
  %v216 = vunpack.c.l.b16 %v148
  %v217 = vunpack.c.l.b16 %v149
  %v218 = vunpack.c.l.b16 %v150
  %v219 = vpack.c.b16 %v188, %v187
  %v220 = vpack.c.b16 %v190, %v189
  %v221 = vpack.c.b16 %v192, %v191
  %v222 = vpack.c.b16 %v194, %v193
  %v223 = vpack.c.b16 %v196, %v195
  %v224 = vpack.c.b16 %v198, %v197
  %v225 = vpack.c.b16 %v200, %v199
  %v226 = vpack.c.b16 %v202, %v201
  %v227 = vpack.c.b16 %v204, %v203
  %v228 = vpack.c.b16 %v206, %v205
  %v229 = vpack.c.b16 %v208, %v207
  %v230 = vpack.c.b16 %v210, %v209
  %v231 = vpack.c.b16 %v212, %v211
  %v232 = vpack.c.b16 %v214, %v213
  %v233 = vpack.c.b16 %v216, %v215
  %v234 = vpack.c.b16 %v218, %v217
  %251 = vmatpush.bf16.msra.mxu0 %v226
  %252 = vmatpush.bf16.msra.mxu0 %v225
  %253 = vmatpush.bf16.msra.mxu0 %v224
  %254 = vmatpush.bf16.msra.mxu0 %v223
  %255 = vmatpush.bf16.msra.mxu0 %v222
  %256 = vmatpush.bf16.msra.mxu0 %v221
  %257 = vmatpush.bf16.msra.mxu0 %v220
  %258 = vmatpush.bf16.msra.mxu0 %v219
  %259 = vmatmul.bf16.gmra.mxu0 %v117
  %v260 = vpop.f32.mrf.mxu0
  %v261 = vadd.f32 %v153, %v260
  %v262 = vpop.f32.mrf.mxu0
  %263 = vdwg.mxu0
  %264 = vmatpush.bf16.msra.mxu0 %v234
  %265 = vmatpush.bf16.msra.mxu0 %v233
  %266 = vmatpush.bf16.msra.mxu0 %v232
  %267 = vmatpush.bf16.msra.mxu0 %v231
  %268 = vmatpush.bf16.msra.mxu0 %v230
  %269 = vmatpush.bf16.msra.mxu0 %v229
  %270 = vmatpush.bf16.msra.mxu0 %v228
  %271 = vmatpush.bf16.msra.mxu0 %v227
  %272 = vmatmul.bf16.gmra.mxu0 %v118
  %v273 = vpop.f32.mrf.mxu0
  %v274 = vadd.f32 %v261, %v273
  %v275 = vpop.f32.mrf.mxu0
  %276 = vdwg.mxu0
  %v277 = vmax.f32 %v274, 0.0
  %v278 = vpack.c.bf16 %v277, %v277
  %v279 = vld [vmem:[%s5] sm:$0xf]
  %v280 = vld [vmem:[%s5 + $0x4] sm:$0xf]
  %v281 = vld [vmem:[%s5 + $0x8] sm:$0xf]
  %v282 = vld [vmem:[%s5 + $0xc] sm:$0xf]
  %v283 = vld [vmem:[%s5 + $0x10] sm:$0xf]
  %v284 = vld [vmem:[%s5 + $0x14] sm:$0xf]
  %v285 = vld [vmem:[%s5 + $0x18] sm:$0xf]
  %v286 = vld [vmem:[%s5 + $0x1c] sm:$0xf]
  %v287 = vld [vmem:[%s5 + $0x20] sm:$0xf]
  %v288 = vld [vmem:[%s5 + $0x24] sm:$0xf]
  %v289 = vld [vmem:[%s5 + $0x28] sm:$0xf]
  %v290 = vld [vmem:[%s5 + $0x2c] sm:$0xf]
  %v291 = vld [vmem:[%s5 + $0x30] sm:$0xf]
  %v292 = vld [vmem:[%s5 + $0x34] sm:$0xf]
  %v293 = vld [vmem:[%s5 + $0x38] sm:$0xf]
  %v294 = vld [vmem:[%s5 + $0x3c] sm:$0xf]
  %v295 = vld [vmem:[%s6] sm:$0x1]
  %v297 = vperm.slane %v295, 0
  %v315 = vunpack.c.l.b16 %v279
  %v316 = vunpack.c.l.b16 %v280
  %v317 = vunpack.c.l.b16 %v281
  %v318 = vunpack.c.l.b16 %v282
  %v319 = vunpack.c.l.b16 %v283
  %v320 = vunpack.c.l.b16 %v284
  %v321 = vunpack.c.l.b16 %v285
  %v322 = vunpack.c.l.b16 %v286
  %v323 = vunpack.c.l.b16 %v287
  %v324 = vunpack.c.l.b16 %v288
  %v325 = vunpack.c.l.b16 %v289
  %v326 = vunpack.c.l.b16 %v290
  %v327 = vunpack.c.l.b16 %v291
  %v328 = vunpack.c.l.b16 %v292
  %v329 = vunpack.c.l.b16 %v293
  %v330 = vunpack.c.l.b16 %v294
  %v331 = vpack.c.b16 %v316, %v315
  %v332 = vpack.c.b16 %v318, %v317
  %v333 = vpack.c.b16 %v320, %v319
  %v334 = vpack.c.b16 %v322, %v321
  %v335 = vpack.c.b16 %v324, %v323
  %v336 = vpack.c.b16 %v326, %v325
  %v337 = vpack.c.b16 %v328, %v327
  %v338 = vpack.c.b16 %v330, %v329
  %347 = vmatpush.bf16.msra.mxu0 %v338
  %348 = vmatpush.bf16.msra.mxu0 %v337
  %349 = vmatpush.bf16.msra.mxu0 %v336
  %350 = vmatpush.bf16.msra.mxu0 %v335
  %351 = vmatpush.bf16.msra.mxu0 %v334
  %352 = vmatpush.bf16.msra.mxu0 %v333
  %353 = vmatpush.bf16.msra.mxu0 %v332
  %354 = vmatpush.bf16.msra.mxu0 %v331
  %355 = vmatmul.bf16.gmra.mxu0 %v278
  %v356 = vpop.f32.mrf.mxu0
  %v357 = vadd.f32 %v297, %v356
  %v358 = vpop.f32.mrf.mxu0
  %359 = vdwg.mxu0
  %360 = vst [vmem:[%s7] sm:$0xff] %v357
  %361 = vmax.xlane.f32.xlu0 %v357
  %v362 = vpop.xlane.xlu0 %361
  %v363 = vsub.f32 %v357, %v362
  %v364 = vmul.f32 %v363, 1.442695
  %v365 = vpow.pop %v364
  %366 = vadd.xlane.f32.xlu0 %v365
  %v367 = vpop.xlane.xlu0 %366
  %v368 = vlog2.pop %v367
  %v369 = vmul.f32 %v368, 0.6931472
  %v370 = vadd.f32 %v362, %v369
  %vm371 = vcmask 7168
  %372 = vst.msk [vmem:[%s8] sm:$0xff] %vm371, %v370
  // Predicated region
  $region30: #{sac_policy_forward.1} parent=0 // pred_check
    _
  $region31: #{sac_policy_forward.1} parent=0 // pred_check_branch
    %374 = sbr.rel (0) target = $region33
  $region32: #{sac_policy_forward.1} parent=0 // pred_region
    _
  $region33: #{sac_policy_forward.1} parent=0 // pred_fallthru
    _
  // Predicated region
  $region34: #{sac_policy_forward.1} parent=0 // pred_check
    _
  $region35: #{sac_policy_forward.1} parent=0 // pred_check_branch
    %376 = sbr.rel (0) target = $region37
  $region36: #{sac_policy_forward.1} parent=0 // pred_region
    _
  $region37: #{sac_policy_forward.1} parent=0 // pred_fallthru
    _
  // Predicated region
  $region38: #{sac_policy_forward.1} parent=0 // pred_check
    _
  $region39: #{sac_policy_forward.1} parent=0 // pred_check_branch
    %378 = sbr.rel (0) target = $region41
  $region40: #{sac_policy_forward.1} parent=0 // pred_region
    _
  $region41: #{sac_policy_forward.1} parent=0 // pred_fallthru
    _
  // Predicated region
  $region42: #{sac_policy_forward.1} parent=0 // pred_check
    _
  $region43: #{sac_policy_forward.1} parent=0 // pred_check_branch
    %380 = sbr.rel (0) target = $region45
  $region44: #{sac_policy_forward.1} parent=0 // pred_region
    _
  $region45: #{sac_policy_forward.1} parent=0 // pred_fallthru
    _

</llo_original>
